<compile_context>
chip_gen: v5e
topology: v5e:2x2
jax: 0.10.0
libtpu: 0.0.40
codegen_flags: <defaults>
</compile_context>

<pallas_src>
import functools

import jax
import jax.numpy as jnp
from jax.experimental import pallas as pl
from jax.experimental.pallas import tpu as pltpu


def _round_up(n, m):
    return ((n + m - 1) // m) * m


def _combine_coeffs(c, pattern, order, d):
    """(order*d+1,) PCE coefficients -> (d, order+1) Horner coefficient matrix.

    Row j holds monomial coefficients of P_j(x) = sum_m A[j, m] * x^m, with the
    global constant c[0] folded into feature 0, so pred_i = sum_j P_j(x_ij)
    reproduces torch.sum(X * c, dim=1) of the original module (including the
    verbatim order-4 'PCE' term 9x^4 + 45x^3 - 135x^2 - 27).
    """
    c = c.astype(jnp.float32)
    ck = [c[1 + k * d: 1 + (k + 1) * d] for k in range(order)]   # per-term (d,)
    a = [jnp.zeros((d,), jnp.float32) for _ in range(order + 1)]
    if pattern == 'PCE':
        a[1] = a[1] + ck[0]                         # X2 = x
        if order >= 2:                              # X3 = x^2 - 1
            a[2] = a[2] + ck[1]
            a[0] = a[0] - ck[1]
        if order >= 3:                              # X4 = x^3 - 3x
            a[3] = a[3] + ck[2]
            a[1] = a[1] - 3.0 * ck[2]
        if order >= 4:                              # X5 = 9x^4 + 45x^3 - 135x^2 - 27
            a[4] = a[4] + 9.0 * ck[3]
            a[3] = a[3] + 45.0 * ck[3]
            a[2] = a[2] - 135.0 * ck[3]
            a[0] = a[0] - 27.0 * ck[3]
    elif pattern == 'polynomial':
        for k in range(1, order + 1):               # x, x^2, x^3, x^4
            a[k] = a[k] + ck[k - 1]
    else:
        raise ValueError(f"unknown pattern {pattern!r}")
    A = jnp.stack(a, axis=1)                        # (d, order+1)
    A = A.at[0, 0].add(c[0])                        # fold the constant column X1
    return A


def _make_kernel(order: int, tile_rows: int, n_rows: int,
                 mask_start: int, need_mask: bool):
    def kernel(x_ref, y_ref, coef_ref, sel_ref, out_ref, acc_ref):
        t = pl.program_id(1)

        @pl.when(t == 0)
        def _init():
            acc_ref[...] = jnp.zeros_like(acc_ref)

        x = x_ref[...].astype(jnp.float32)            # (TR, 128), lanes = D-interleaved
        cf = coef_ref[...]                            # (order+1, 128) f32

        # Per-feature Horner polynomial; (1, 128) coefficient rows broadcast
        # over sublanes (samples), no per-step full-tile coefficient planes.
        h = cf[order:order + 1, :]
        for k in range(order - 1, -1, -1):
            h = h * x + cf[k:k + 1, :]

        # Per-sample feature reduction + compaction in one MXU matmul:
        # (TR, 128) @ (128, spd) -> (TR, spd), sample s = row*spd + col.
        pred = jnp.dot(h, sel_ref[...], preferred_element_type=jnp.float32)
        err = jnp.abs(pred - y_ref[...].astype(jnp.float32))   # (TR, spd)

        def accumulate(e):
            acc_ref[...] += jnp.sum(e, axis=0, keepdims=True)   # sublane reduce

        if need_mask:
            # Row mask only on boundary / clamped-duplicate tiles.
            gt = pl.program_id(0) * pl.num_programs(1) + t      # global tile index

            @pl.when(gt >= mask_start)
            def _masked():
                rows = gt * tile_rows + jax.lax.broadcasted_iota(
                    jnp.int32, err.shape, 0)
                accumulate(jnp.where(rows < n_rows, err, 0.0))

            @pl.when(gt < mask_start)
            def _unmasked():
                accumulate(err)
        else:
            accumulate(err)

        @pl.when(t == pl.num_programs(1) - 1)
        def _flush():
            out_ref[0] = acc_ref[...]                 # (1, spd) partial sums

    return kernel


@functools.partial(
    jax.jit,
    static_argnames=("pattern", "order", "tile_rows", "num_partitions"))
def pce_loss(x, y, c, *, pattern: str = "PCE", order: int = 2,
             tile_rows=None, num_partitions: int = 2):
    """Pallas TPU implementation of PCELoss.forward.

    x: (N, D), y: (N, 1), c: (order*D + 1,).  Returns a scalar float32 loss.
    """
    n, d = x.shape
    f = order * d + 1
    assert c.shape == (f,), f"expected c of shape ({f},), got {c.shape}"
    assert y.shape == (n, 1)
    assert 1 <= order <= 4

    if not jnp.issubdtype(x.dtype, jnp.floating):
        x = x.astype(jnp.float32)
    if not jnp.issubdtype(y.dtype, jnp.floating):
        y = y.astype(jnp.float32)

    # Pad the feature dim to a power of two so 128 % D_pad == 0.
    d_pad = 1
    while d_pad < d:
        d_pad *= 2
    # TODO(synk): feature dims > 128 need a multi-row group reduction.
    assert d_pad <= 128, "D > 128 not supported by this kernel"
    spd = 128 // d_pad                                   # samples per 128-lane row

    A = _combine_coeffs(c, pattern, order, d)            # (d, order+1)
    if d_pad != d:
        # Fallback copy of x; padded features get zero coefficients -> contribute 0.
        A = jnp.concatenate([A, jnp.zeros((d_pad - d, order + 1), jnp.float32)], 0)
        x = jnp.pad(x, ((0, 0), (0, d_pad - d)))
    coef = jnp.tile(A.T, (1, spd))                       # (order+1, 128)
    base = jnp.sum(A[:, 0])                              # prediction for an all-zero sample

    xf = x.reshape(-1)                                   # free row-major flatten
    yf = y.reshape(-1)
    total = n * d_pad
    if total % 128 != 0:
        # One unavoidable copy: pad flat x with zeros to a lane multiple and pad
        # y with `base` so padded (zero-x) samples contribute |base - base| == 0.
        pad_elems = 128 - total % 128
        xf = jnp.pad(xf, (0, pad_elems))
        yf = jnp.concatenate(
            [yf, jnp.full((pad_elems // d_pad,), base, dtype=yf.dtype)])
        total += pad_elems
    n_rows = total // 128
    x2 = xf.reshape(n_rows, 128)                         # free when no pad was needed
    y2 = yf.reshape(n_rows, spd)

    if tile_rows is None:
        tile_rows = 4096                                 # ~2 MiB of f32 x per grid step
    tr = max(8, min(_round_up(int(tile_rows), 8), _round_up(n_rows, 8)))

    p_ax = max(1, int(num_partitions))
    n_tiles = pl.cdiv(n_rows, tr)
    tpc = pl.cdiv(n_tiles, p_ax)                         # tiles per core
    ragged = (n_rows % tr) != 0
    mask_start = n_tiles - 1 if ragged else n_tiles
    need_mask = mask_start < p_ax * tpc

    # Block-diagonal selector: sel[l, s] = 1 iff lane l belongs to sample slot s.
    lane = jnp.arange(128, dtype=jnp.int32)
    sel = (lane[:, None] // d_pad ==
           jnp.arange(spd, dtype=jnp.int32)[None, :]).astype(jnp.float32)

    # Clamp the tile index so clamped duplicate tiles stay in-bounds; their
    # contribution is zeroed by the row mask in the kernel.
    tile_idx = lambda pi, ti: (jnp.minimum(pi * tpc + ti, n_tiles - 1), 0)

    kernel = _make_kernel(order, tr, n_rows, mask_start, need_mask)
    partial_sums = pl.pallas_call(
        kernel,
        out_shape=jax.ShapeDtypeStruct((p_ax, 1, spd), jnp.float32),
        grid=(p_ax, tpc),
        in_specs=[
            pl.BlockSpec((tr, 128), tile_idx),                    # x tile
            pl.BlockSpec((tr, spd), tile_idx),                    # y tile
            pl.BlockSpec((order + 1, 128), lambda pi, ti: (0, 0)),  # Horner coeffs
            pl.BlockSpec((128, spd), lambda pi, ti: (0, 0)),        # selector
        ],
        out_specs=pl.BlockSpec((1, 1, spd), lambda pi, ti: (pi, 0, 0)),
        scratch_shapes=[pltpu.VMEM((1, spd), jnp.float32)],
        compiler_params=pltpu.CompilerParams(
            dimension_semantics=("parallel", "arbitrary"),
            vmem_limit_bytes=32 * 1024 * 1024),
    )(x2, y2, coef, sel)

    return jnp.sum(partial_sums) / jnp.float32(n)


def _reference(x, y, c, pattern="PCE", order=2):
    """Pure-JAX reference mirroring the torch code (for sanity checking)."""
    n = x.shape[0]
    cols = [jnp.ones((n, 1), jnp.float32), x]
    if pattern == "PCE":
        if order >= 2:
            cols.append(x ** 2 - 1)
        if order >= 3:
            cols.append(x ** 3 - 3 * x)
        if order >= 4:
            cols.append(9 * x ** 4 + 45 * x ** 3 - 135 * x ** 2 - 27)
    else:
        if order >= 2:
            cols.append(x ** 2)
        if order >= 3:
            cols.append(x ** 3)
        if order >= 4:
            cols.append(x ** 4)
    X = jnp.concatenate(cols, axis=1)
    return jnp.mean(jnp.abs(jnp.sum(X * c, axis=1).reshape(-1, 1) - y))


if __name__ == "__main__":
    key = jax.random.PRNGKey(0)

    # (pattern, order, N, D, tile_rows)
    cases = [
        ("PCE", 2, 8, 4, None),            # single ragged tile
        ("PCE", 4, 200, 4, None),          # ragged flat pad + y base-pad
        ("polynomial", 3, 33, 4, None),
        ("PCE", 3, 256, 4, None),          # zero-copy reshape path
        ("PCE", 4, 5000, 4, 128),          # multi-tile, ragged boundary, 2-way split
        ("polynomial", 2, 16384, 4, 128),  # multi-step accumulation per core
        ("PCE", 2, 12288, 4, 128),         # odd tile count -> clamped duplicate tile
    ]

    all_ok = True
    for pattern, order, n, d, tile_rows in cases:
        key, kx, ky, kc = jax.random.split(key, 4)
        f = order * d + 1
        x = jax.random.normal(kx, (n, d), dtype=jnp.float32)
        y = jax.random.normal(ky, (n, 1), dtype=jnp.float32)
        c = jax.random.normal(kc, (f,), dtype=jnp.float32)

        loss = pce_loss(x, y, c, pattern=pattern, order=order, tile_rows=tile_rows)
        jax.block_until_ready(loss)

        ref = _reference(x, y, c, pattern=pattern, order=order)
        case_ok = bool(jnp.allclose(loss, ref, rtol=5e-4, atol=5e-4))
        all_ok = all_ok and case_ok

    assert all_ok, "Pallas PCE loss does not match reference"
    print("KERNEL_OK")
</pallas_src>

<mosaic_0001>
module attributes {stable_mosaic.version = 11 : i64} {
  func.func @kernel(%arg0: i32, %arg1: i32, %arg2: memref<8x128xf32, #tpu.memory_space<vmem>>, %arg3: memref<8x32xf32, #tpu.memory_space<vmem>>, %arg4: memref<3x128xf32, #tpu.memory_space<vmem>>, %arg5: memref<128x32xf32, #tpu.memory_space<vmem>>, %arg6: memref<1x1x32xf32, #tpu.memory_space<vmem>>, %arg7: memref<1x32xf32, #tpu.memory_space<vmem>>) attributes {dimension_semantics = [#tpu.dimension_semantics<parallel>, #tpu.dimension_semantics<arbitrary>], iteration_bounds = array<i64: 2, 1>, scalar_prefetch = 0 : i64, scratch_operands = 1 : i64, tpu.core_type = #tpu.core_type<tc>, window_params = [{transform_indices = @transform_0, window_bounds = array<i64: 8, 128>}, {transform_indices = @transform_1, window_bounds = array<i64: 8, 32>}, {pipeline_mode = #tpu.pipeline_mode<synchronous>, transform_indices = @transform_2, window_bounds = array<i64: 3, 128>}, {pipeline_mode = #tpu.pipeline_mode<synchronous>, transform_indices = @transform_3, window_bounds = array<i64: 128, 32>}, {transform_indices = @transform_4, window_bounds = array<i64: 1, 1, 32>}]} {
    %c0_i32 = arith.constant 0 : i32
    %0 = arith.cmpi eq, %arg1, %c0_i32 : i32
    %1 = arith.extui %0 : i1 to i32
    %c0_i32_0 = arith.constant 0 : i32
    %2 = arith.cmpi ne, %1, %c0_i32_0 : i32
    scf.if %2 {
      %cst_14 = arith.constant 0.000000e+00 : f32
      %31 = vector.broadcast %cst_14 : f32 to vector<1x32xf32>
      %c0_15 = arith.constant 0 : index
      %c0_16 = arith.constant 0 : index
      %32 = vector.load %arg7[%c0_15, %c0_16] : memref<1x32xf32, #tpu.memory_space<vmem>>, vector<1x32xf32>
      tpu.vector_store %arg7[%c0_15, %c0_16], %31 {strides = array<i32>} : memref<1x32xf32, #tpu.memory_space<vmem>>, vector<1x32xf32>,
    } else {
    }
    %c0 = arith.constant 0 : index
    %c0_1 = arith.constant 0 : index
    %3 = vector.load %arg2[%c0, %c0_1] : memref<8x128xf32, #tpu.memory_space<vmem>>, vector<8x128xf32>
    %c0_2 = arith.constant 0 : index
    %c0_3 = arith.constant 0 : index
    %4 = vector.load %arg4[%c0_2, %c0_3] : memref<3x128xf32, #tpu.memory_space<vmem>>, vector<3x128xf32>
    %5 = vector.extract_strided_slice %4 {offsets = [2, 0], sizes = [1, 128], strides = [1, 1]} : vector<3x128xf32> to vector<1x128xf32>
    %6 = vector.broadcast %5 : vector<1x128xf32> to vector<8x128xf32>
    %7 = arith.mulf %6, %3 : vector<8x128xf32>
    %8 = vector.extract_strided_slice %4 {offsets = [1, 0], sizes = [1, 128], strides = [1, 1]} : vector<3x128xf32> to vector<1x128xf32>
    %9 = vector.broadcast %8 : vector<1x128xf32> to vector<8x128xf32>
    %10 = arith.addf %7, %9 : vector<8x128xf32>
    %11 = arith.mulf %10, %3 : vector<8x128xf32>
    %12 = vector.extract_strided_slice %4 {offsets = [0, 0], sizes = [1, 128], strides = [1, 1]} : vector<3x128xf32> to vector<1x128xf32>
    %13 = vector.broadcast %12 : vector<1x128xf32> to vector<8x128xf32>
    %14 = arith.addf %11, %13 : vector<8x128xf32>
    %c0_4 = arith.constant 0 : index
    %c0_5 = arith.constant 0 : index
    %15 = vector.load %arg5[%c0_4, %c0_5] : memref<128x32xf32, #tpu.memory_space<vmem>>, vector<128x32xf32>
    %cst = arith.constant dense<0.000000e+00> : vector<8x32xf32>
    %16 = tpu.matmul %14, %15, %cst {dimension_numbers = #tpu.dot_dimension_numbers<[1], [0], [0], [1], [0, 0, 1, 1], [], []>} : vector<8x128xf32>, vector<128x32xf32>, vector<8x32xf32> -> vector<8x32xf32>
    %c0_6 = arith.constant 0 : index
    %c0_7 = arith.constant 0 : index
    %17 = vector.load %arg3[%c0_6, %c0_7] : memref<8x32xf32, #tpu.memory_space<vmem>>, vector<8x32xf32>
    %18 = arith.subf %16, %17 : vector<8x32xf32>
    %19 = math.absf %18 : vector<8x32xf32>
    %c1_i32 = arith.constant 1 : i32
    %20 = arith.muli %arg0, %c1_i32 : i32
    %21 = arith.addi %20, %arg1 : i32
    %c0_i32_8 = arith.constant 0 : i32
    %22 = arith.cmpi sge, %21, %c0_i32_8 : i32
    %23 = arith.extui %22 : i1 to i32
    %c0_i32_9 = arith.constant 0 : i32
    %24 = arith.cmpi ne, %23, %c0_i32_9 : i32
    scf.if %24 {
      %c8_i32 = arith.constant 8 : i32
      %31 = arith.muli %21, %c8_i32 : i32
      %32 = tpu.iota {dimensions = array<i32: 0>} : vector<8x32xi32>
      %33 = vector.broadcast %31 : i32 to vector<8x32xi32>
      %34 = arith.addi %33, %32 : vector<8x32xi32>
      %c1_i32_14 = arith.constant 1 : i32
      %35 = vector.broadcast %c1_i32_14 : i32 to vector<8x32xi32>
      %36 = arith.cmpi slt, %34, %35 : vector<8x32xi32>
      %cst_15 = arith.constant 0.000000e+00 : f32
      %37 = vector.broadcast %cst_15 : f32 to vector<8x32xf32>
      %38 = arith.select %36, %19, %37 : vector<8x32xi1>, vector<8x32xf32>
      %c0_16 = arith.constant 0 : index
      %c0_17 = arith.constant 0 : index
      %39 = vector.load %arg7[%c0_16, %c0_17] : memref<1x32xf32, #tpu.memory_space<vmem>>, vector<1x32xf32>
      %cst_18 = arith.constant dense<0.000000e+00> : vector<32xf32>
      %40 = vector.multi_reduction <add>, %38, %cst_18 [0] : vector<8x32xf32> to vector<32xf32>
      %41 = vector.shape_cast %40 : vector<32xf32> to vector<1x32xf32>
      %42 = arith.addf %39, %41 : vector<1x32xf32>
      %c0_19 = arith.constant 0 : index
      %c0_20 = arith.constant 0 : index
      %43 = vector.load %arg7[%c0_19, %c0_20] : memref<1x32xf32, #tpu.memory_space<vmem>>, vector<1x32xf32>
      tpu.vector_store %arg7[%c0_19, %c0_20], %42 {strides = array<i32>} : memref<1x32xf32, #tpu.memory_space<vmem>>, vector<1x32xf32>,
    } else {
    }
    %c0_i32_10 = arith.constant 0 : i32
    %25 = arith.cmpi slt, %21, %c0_i32_10 : i32
    %26 = arith.extui %25 : i1 to i32
    %c0_i32_11 = arith.constant 0 : i32
    %27 = arith.cmpi ne, %26, %c0_i32_11 : i32
    scf.if %27 {
      %c0_14 = arith.constant 0 : index
      %c0_15 = arith.constant 0 : index
      %31 = vector.load %arg7[%c0_14, %c0_15] : memref<1x32xf32, #tpu.memory_space<vmem>>, vector<1x32xf32>
      %cst_16 = arith.constant dense<0.000000e+00> : vector<32xf32>
      %32 = vector.multi_reduction <add>, %19, %cst_16 [0] : vector<8x32xf32> to vector<32xf32>
      %33 = vector.shape_cast %32 : vector<32xf32> to vector<1x32xf32>
      %34 = arith.addf %31, %33 : vector<1x32xf32>
      %c0_17 = arith.constant 0 : index
      %c0_18 = arith.constant 0 : index
      %35 = vector.load %arg7[%c0_17, %c0_18] : memref<1x32xf32, #tpu.memory_space<vmem>>, vector<1x32xf32>
      tpu.vector_store %arg7[%c0_17, %c0_18], %34 {strides = array<i32>} : memref<1x32xf32, #tpu.memory_space<vmem>>, vector<1x32xf32>,
    } else {
    }
    %c0_i32_12 = arith.constant 0 : i32
    %28 = arith.cmpi eq, %arg1, %c0_i32_12 : i32
    %29 = arith.extui %28 : i1 to i32
    %c0_i32_13 = arith.constant 0 : i32
    %30 = arith.cmpi ne, %29, %c0_i32_13 : i32
    scf.if %30 {
      %c0_14 = arith.constant 0 : index
      %c0_15 = arith.constant 0 : index
      %31 = vector.load %arg7[%c0_14, %c0_15] : memref<1x32xf32, #tpu.memory_space<vmem>>, vector<1x32xf32>
      %c0_16 = arith.constant 0 : index
      %c0_17 = arith.constant 0 : index
      %c0_18 = arith.constant 0 : index
      %32 = vector.load %arg6[%c0_16, %c0_17, %c0_18] : memref<1x1x32xf32, #tpu.memory_space<vmem>>, vector<1x1x32xf32>
      %33 = vector.shape_cast %32 : vector<1x1x32xf32> to vector<1x32xf32>
      %34 = vector.shape_cast %31 : vector<1x32xf32> to vector<1x1x32xf32>
      tpu.vector_store %arg6[%c0_16, %c0_17, %c0_18], %34 {strides = array<i32>} : memref<1x1x32xf32, #tpu.memory_space<vmem>>, vector<1x1x32xf32>,
    } else {
    }
    return
  }
  func.func @transform_0(%arg0: i32, %arg1: i32) -> (i32, i32) {
    %c1_i32 = arith.constant 1 : i32
    %0 = arith.muli %arg0, %c1_i32 : i32
    %1 = arith.addi %0, %arg1 : i32
    %c0_i32 = arith.constant 0 : i32
    %2 = arith.minsi %1, %c0_i32 : i32
    %c0_i32_0 = arith.constant 0 : i32
    %c0_i32_1 = arith.constant 0 : i32
    return %2, %c0_i32_0 : i32, i32
  }
  func.func @transform_1(%arg0: i32, %arg1: i32) -> (i32, i32) {
    %c1_i32 = arith.constant 1 : i32
    %0 = arith.muli %arg0, %c1_i32 : i32
    %1 = arith.addi %0, %arg1 : i32
    %c0_i32 = arith.constant 0 : i32
    %2 = arith.minsi %1, %c0_i32 : i32
    %c0_i32_0 = arith.constant 0 : i32
    %c0_i32_1 = arith.constant 0 : i32
    return %2, %c0_i32_0 : i32, i32
  }
  func.func @transform_2(%arg0: i32, %arg1: i32) -> (i32, i32) {
    %c0_i32 = arith.constant 0 : i32
    %c0_i32_0 = arith.constant 0 : i32
    %c0_i32_1 = arith.constant 0 : i32
    return %c0_i32, %c0_i32_0 : i32, i32
  }
  func.func @transform_3(%arg0: i32, %arg1: i32) -> (i32, i32) {
    %c0_i32 = arith.constant 0 : i32
    %c0_i32_0 = arith.constant 0 : i32
    %c0_i32_1 = arith.constant 0 : i32
    return %c0_i32, %c0_i32_0 : i32, i32
  }
  func.func @transform_4(%arg0: i32, %arg1: i32) -> (i32, i32, i32) {
    %c0_i32 = arith.constant 0 : i32
    %c0_i32_0 = arith.constant 0 : i32
    %c0_i32_1 = arith.constant 0 : i32
    return %arg0, %c0_i32, %c0_i32_0 : i32, i32, i32
  }
}

</mosaic_0001>

<llo_original>
// kernel: tile.9
$region0: #{tile.9}
  %s0 = inlined_call_operand.vmem [shape: f32[3,32,4], index: 0, kind: input, shape index: {}]
  %s1 = inlined_call_operand.vmem [shape: f32[3,128], index: 1, kind: output, shape index: {}]
  $region1: #{tile.9} parent=0
    #allocation0 [shape = 'u8[4096]{0}', space=vmem, size = 0x1000, scoped, tag = 'scoped mem for output reshape']
    %v2 = vld [vmem:[%s0] sm:$0x1]
    %s3 = scalar_lea.vmem %s0, 31
    %v4 = vld [vmem:[%s3] sm:$0x2]
    %vm5 = vcmask 1041409
    %v6 = vsel %vm5, %v4, %v2
    %s7 = scalar_lea.vmem %s0, 62
    %v8 = vld [vmem:[%s7] sm:$0x4]
    %vm9 = vcmask 1042434
    %v10 = vsel %vm9, %v8, %v6
    %vm11 = vcmask 31744
    %12 = vst.msk [vmem:[#allocation0] sm:$0x7] %vm11, %v10
    %s13 = scalar_lea.vmem %s0, 31
    %v14 = vld [vmem:[%s13] sm:$0x1]
    %s15 = scalar_lea.vmem %s0, 62
    %v16 = vld [vmem:[%s15] sm:$0x2]
    %vm17 = vcmask 1041409
    %v18 = vsel %vm17, %v16, %v14
    %s19 = scalar_lea.vmem %s0, 93
    %v20 = vld [vmem:[%s19] sm:$0x4]
    %vm21 = vcmask 1042434
    %v22 = vsel %vm21, %v20, %v18
    %23 = vrot.lane.b32.xlu0 %v22, 124
    %v24 = vpop.permute.xlu0 %23
    %vm25 = vcmask 1048544
    %26 = vst.msk [vmem:[#allocation0] sm:$0x7] %vm25, %v24
    %s27 = scalar_lea.vmem %s0, 30
    %v28 = vld [vmem:[%s27] sm:$0x1]
    %s29 = scalar_lea.vmem %s0, 61
    %v30 = vld [vmem:[%s29] sm:$0x2]
    %vm31 = vcmask 1041409
    %v32 = vsel %vm31, %v30, %v28
    %s33 = scalar_lea.vmem %s0, 92
    %v34 = vld [vmem:[%s33] sm:$0x4]
    %vm35 = vcmask 1042434
    %v36 = vsel %vm35, %v34, %v32
    %37 = vrot.lane.b32.xlu0 %v36, 120
    %v38 = vpop.permute.xlu0 %37
    %vm39 = vcmask 1015744
    %40 = vst.msk [vmem:[#allocation0] sm:$0x7] %vm39, %v38
    %s41 = scalar_lea.vmem %s0, 29
    %v42 = vld [vmem:[%s41] sm:$0x1]
    %s43 = scalar_lea.vmem %s0, 60
    %v44 = vld [vmem:[%s43] sm:$0x2]
    %vm45 = vcmask 1041409
    %v46 = vsel %vm45, %v44, %v42
    %s47 = scalar_lea.vmem %s0, 91
    %v48 = vld [vmem:[%s47] sm:$0x4]
    %vm49 = vcmask 1042434
    %v50 = vsel %vm49, %v48, %v46
    %51 = vrot.lane.b32.xlu0 %v50, 116
    %v52 = vpop.permute.xlu0 %51
    %vm53 = vcmask 982944
    %54 = vst.msk [vmem:[#allocation0] sm:$0x7] %vm53, %v52
    %s55 = scalar_lea.vmem %s0, 28
    %v56 = vld [vmem:[%s55] sm:$0x1]
    %s57 = scalar_lea.vmem %s0, 59
    %v58 = vld [vmem:[%s57] sm:$0x2]
    %vm59 = vcmask 1041409
    %v60 = vsel %vm59, %v58, %v56
    %s61 = scalar_lea.vmem %s0, 90
    %v62 = vld [vmem:[%s61] sm:$0x4]
    %vm63 = vcmask 1042434
    %v64 = vsel %vm63, %v62, %v60
    %65 = vrot.lane.b32.xlu0 %v64, 112
    %v66 = vpop.permute.xlu0 %65
    %vm67 = vcmask 950144
    %68 = vst.msk [vmem:[#allocation0] sm:$0x7] %vm67, %v66
    %s69 = scalar_lea.vmem %s0, 27
    %v70 = vld [vmem:[%s69] sm:$0x1]
    %s71 = scalar_lea.vmem %s0, 58
    %v72 = vld [vmem:[%s71] sm:$0x2]
    %vm73 = vcmask 1041409
    %v74 = vsel %vm73, %v72, %v70
    %s75 = scalar_lea.vmem %s0, 89
    %v76 = vld [vmem:[%s75] sm:$0x4]
    %vm77 = vcmask 1042434
    %v78 = vsel %vm77, %v76, %v74
    %79 = vrot.lane.b32.xlu0 %v78, 108
    %v80 = vpop.permute.xlu0 %79
    %vm81 = vcmask 917344
    %82 = vst.msk [vmem:[#allocation0] sm:$0x7] %vm81, %v80
    %s83 = scalar_lea.vmem %s0, 26
    %v84 = vld [vmem:[%s83] sm:$0x1]
    %s85 = scalar_lea.vmem %s0, 57
    %v86 = vld [vmem:[%s85] sm:$0x2]
    %vm87 = vcmask 1041409
    %v88 = vsel %vm87, %v86, %v84
    %s89 = scalar_lea.vmem %s0, 88
    %v90 = vld [vmem:[%s89] sm:$0x4]
    %vm91 = vcmask 1042434
    %v92 = vsel %vm91, %v90, %v88
    %93 = vrot.lane.b32.xlu0 %v92, 104
    %v94 = vpop.permute.xlu0 %93
    %vm95 = vcmask 884544
    %96 = vst.msk [vmem:[#allocation0] sm:$0x7] %vm95, %v94
    %s97 = scalar_lea.vmem %s0, 25
    %v98 = vld [vmem:[%s97] sm:$0x1]
    %s99 = scalar_lea.vmem %s0, 56
    %v100 = vld [vmem:[%s99] sm:$0x2]
    %vm101 = vcmask 1041409
    %v102 = vsel %vm101, %v100, %v98
    %s103 = scalar_lea.vmem %s0, 87
    %v104 = vld [vmem:[%s103] sm:$0x4]
    %vm105 = vcmask 1042434
    %v106 = vsel %vm105, %v104, %v102
    %107 = vrot.lane.b32.xlu0 %v106, 100
    %v108 = vpop.permute.xlu0 %107
    %vm109 = vcmask 851744
    %110 = vst.msk [vmem:[#allocation0] sm:$0x7] %vm109, %v108
    %s111 = scalar_lea.vmem %s0, 24
    %v112 = vld [vmem:[%s111] sm:$0x1]
    %s113 = scalar_lea.vmem %s0, 55
    %v114 = vld [vmem:[%s113] sm:$0x2]
    %vm115 = vcmask 1041409
    %v116 = vsel %vm115, %v114, %v112
    %s117 = scalar_lea.vmem %s0, 86
    %v118 = vld [vmem:[%s117] sm:$0x4]
    %vm119 = vcmask 1042434
    %v120 = vsel %vm119, %v118, %v116
    %121 = vrot.lane.b32.xlu0 %v120, 96
    %v122 = vpop.permute.xlu0 %121
    %vm123 = vcmask 818944
    %124 = vst.msk [vmem:[#allocation0] sm:$0x7] %vm123, %v122
    %s125 = scalar_lea.vmem %s0, 23
    %v126 = vld [vmem:[%s125] sm:$0x1]
    %s127 = scalar_lea.vmem %s0, 54
    %v128 = vld [vmem:[%s127] sm:$0x2]
    %vm129 = vcmask 1041409
    %v130 = vsel %vm129, %v128, %v126
    %s131 = scalar_lea.vmem %s0, 85
    %v132 = vld [vmem:[%s131] sm:$0x4]
    %vm133 = vcmask 1042434
    %v134 = vsel %vm133, %v132, %v130
    %135 = vrot.lane.b32.xlu0 %v134, 92
    %v136 = vpop.permute.xlu0 %135
    %vm137 = vcmask 786144
    %138 = vst.msk [vmem:[#allocation0] sm:$0x7] %vm137, %v136
    %s139 = scalar_lea.vmem %s0, 22
    %v140 = vld [vmem:[%s139] sm:$0x1]
    %s141 = scalar_lea.vmem %s0, 53
    %v142 = vld [vmem:[%s141] sm:$0x2]
    %vm143 = vcmask 1041409
    %v144 = vsel %vm143, %v142, %v140
    %s145 = scalar_lea.vmem %s0, 84
    %v146 = vld [vmem:[%s145] sm:$0x4]
    %vm147 = vcmask 1042434
    %v148 = vsel %vm147, %v146, %v144
    %149 = vrot.lane.b32.xlu0 %v148, 88
    %v150 = vpop.permute.xlu0 %149
    %vm151 = vcmask 753344
    %152 = vst.msk [vmem:[#allocation0] sm:$0x7] %vm151, %v150
    %s153 = scalar_lea.vmem %s0, 21
    %v154 = vld [vmem:[%s153] sm:$0x1]
    %s155 = scalar_lea.vmem %s0, 52
    %v156 = vld [vmem:[%s155] sm:$0x2]
    %vm157 = vcmask 1041409
    %v158 = vsel %vm157, %v156, %v154
    %s159 = scalar_lea.vmem %s0, 83
    %v160 = vld [vmem:[%s159] sm:$0x4]
    %vm161 = vcmask 1042434
    %v162 = vsel %vm161, %v160, %v158
    %163 = vrot.lane.b32.xlu0 %v162, 84
    %v164 = vpop.permute.xlu0 %163
    %vm165 = vcmask 720544
    %166 = vst.msk [vmem:[#allocation0] sm:$0x7] %vm165, %v164
    %s167 = scalar_lea.vmem %s0, 20
    %v168 = vld [vmem:[%s167] sm:$0x1]
    %s169 = scalar_lea.vmem %s0, 51
    %v170 = vld [vmem:[%s169] sm:$0x2]
    %vm171 = vcmask 1041409
    %v172 = vsel %vm171, %v170, %v168
    %s173 = scalar_lea.vmem %s0, 82
    %v174 = vld [vmem:[%s173] sm:$0x4]
    %vm175 = vcmask 1042434
    %v176 = vsel %vm175, %v174, %v172
    %177 = vrot.lane.b32.xlu0 %v176, 80
    %v178 = vpop.permute.xlu0 %177
    %vm179 = vcmask 687744
    %180 = vst.msk [vmem:[#allocation0] sm:$0x7] %vm179, %v178
    %s181 = scalar_lea.vmem %s0, 19
    %v182 = vld [vmem:[%s181] sm:$0x1]
    %s183 = scalar_lea.vmem %s0, 50
    %v184 = vld [vmem:[%s183] sm:$0x2]
    %vm185 = vcmask 1041409
    %v186 = vsel %vm185, %v184, %v182
    %s187 = scalar_lea.vmem %s0, 81
    %v188 = vld [vmem:[%s187] sm:$0x4]
    %vm189 = vcmask 1042434
    %v190 = vsel %vm189, %v188, %v186
    %191 = vrot.lane.b32.xlu0 %v190, 76
    %v192 = vpop.permute.xlu0 %191
    %vm193 = vcmask 654944
    %194 = vst.msk [vmem:[#allocation0] sm:$0x7] %vm193, %v192
    %s195 = scalar_lea.vmem %s0, 18
    %v196 = vld [vmem:[%s195] sm:$0x1]
    %s197 = scalar_lea.vmem %s0, 49
    %v198 = vld [vmem:[%s197] sm:$0x2]
    %vm199 = vcmask 1041409
    %v200 = vsel %vm199, %v198, %v196
    %s201 = scalar_lea.vmem %s0, 80
    %v202 = vld [vmem:[%s201] sm:$0x4]
    %vm203 = vcmask 1042434
    %v204 = vsel %vm203, %v202, %v200
    %205 = vrot.lane.b32.xlu0 %v204, 72
    %v206 = vpop.permute.xlu0 %205
    %vm207 = vcmask 622144
    %208 = vst.msk [vmem:[#allocation0] sm:$0x7] %vm207, %v206
    %s209 = scalar_lea.vmem %s0, 17
    %v210 = vld [vmem:[%s209] sm:$0x1]
    %s211 = scalar_lea.vmem %s0, 48
    %v212 = vld [vmem:[%s211] sm:$0x2]
    %vm213 = vcmask 1041409
    %v214 = vsel %vm213, %v212, %v210
    %s215 = scalar_lea.vmem %s0, 79
    %v216 = vld [vmem:[%s215] sm:$0x4]
    %vm217 = vcmask 1042434
    %v218 = vsel %vm217, %v216, %v214
    %219 = vrot.lane.b32.xlu0 %v218, 68
    %v220 = vpop.permute.xlu0 %219
    %vm221 = vcmask 589344
    %222 = vst.msk [vmem:[#allocation0] sm:$0x7] %vm221, %v220
    %s223 = scalar_lea.vmem %s0, 16
    %v224 = vld [vmem:[%s223] sm:$0x1]
    %s225 = scalar_lea.vmem %s0, 47
    %v226 = vld [vmem:[%s225] sm:$0x2]
    %vm227 = vcmask 1041409
    %v228 = vsel %vm227, %v226, %v224
    %s229 = scalar_lea.vmem %s0, 78
    %v230 = vld [vmem:[%s229] sm:$0x4]
    %vm231 = vcmask 1042434
    %v232 = vsel %vm231, %v230, %v228
    %233 = vrot.lane.b32.xlu0 %v232, 64
    %v234 = vpop.permute.xlu0 %233
    %vm235 = vcmask 556544
    %236 = vst.msk [vmem:[#allocation0] sm:$0x7] %vm235, %v234
    %s237 = scalar_lea.vmem %s0, 15
    %v238 = vld [vmem:[%s237] sm:$0x1]
    %s239 = scalar_lea.vmem %s0, 46
    %v240 = vld [vmem:[%s239] sm:$0x2]
    %vm241 = vcmask 1041409
    %v242 = vsel %vm241, %v240, %v238
    %s243 = scalar_lea.vmem %s0, 77
    %v244 = vld [vmem:[%s243] sm:$0x4]
    %vm245 = vcmask 1042434
    %v246 = vsel %vm245, %v244, %v242
    %247 = vrot.lane.b32.xlu0 %v246, 60
    %v248 = vpop.permute.xlu0 %247
    %vm249 = vcmask 523744
    %250 = vst.msk [vmem:[#allocation0] sm:$0x7] %vm249, %v248
    %s251 = scalar_lea.vmem %s0, 14
    %v252 = vld [vmem:[%s251] sm:$0x1]
    %s253 = scalar_lea.vmem %s0, 45
    %v254 = vld [vmem:[%s253] sm:$0x2]
    %vm255 = vcmask 1041409
    %v256 = vsel %vm255, %v254, %v252
    %s257 = scalar_lea.vmem %s0, 76
    %v258 = vld [vmem:[%s257] sm:$0x4]
    %vm259 = vcmask 1042434
    %v260 = vsel %vm259, %v258, %v256
    %261 = vrot.lane.b32.xlu0 %v260, 56
    %v262 = vpop.permute.xlu0 %261
    %vm263 = vcmask 490944
    %264 = vst.msk [vmem:[#allocation0] sm:$0x7] %vm263, %v262
    %s265 = scalar_lea.vmem %s0, 13
    %v266 = vld [vmem:[%s265] sm:$0x1]
    %s267 = scalar_lea.vmem %s0, 44
    %v268 = vld [vmem:[%s267] sm:$0x2]
    %vm269 = vcmask 1041409
    %v270 = vsel %vm269, %v268, %v266
    %s271 = scalar_lea.vmem %s0, 75
    %v272 = vld [vmem:[%s271] sm:$0x4]
    %vm273 = vcmask 1042434
    %v274 = vsel %vm273, %v272, %v270
    %275 = vrot.lane.b32.xlu0 %v274, 52
    %v276 = vpop.permute.xlu0 %275
    %vm277 = vcmask 458144
    %278 = vst.msk [vmem:[#allocation0] sm:$0x7] %vm277, %v276
    %s279 = scalar_lea.vmem %s0, 12
    %v280 = vld [vmem:[%s279] sm:$0x1]
    %s281 = scalar_lea.vmem %s0, 43
    %v282 = vld [vmem:[%s281] sm:$0x2]
    %vm283 = vcmask 1041409
    %v284 = vsel %vm283, %v282, %v280
    %s285 = scalar_lea.vmem %s0, 74
    %v286 = vld [vmem:[%s285] sm:$0x4]
    %vm287 = vcmask 1042434
    %v288 = vsel %vm287, %v286, %v284
    %289 = vrot.lane.b32.xlu0 %v288, 48
    %v290 = vpop.permute.xlu0 %289
    %vm291 = vcmask 425344
    %292 = vst.msk [vmem:[#allocation0] sm:$0x7] %vm291, %v290
    %s293 = scalar_lea.vmem %s0, 11
    %v294 = vld [vmem:[%s293] sm:$0x1]
    %s295 = scalar_lea.vmem %s0, 42
    %v296 = vld [vmem:[%s295] sm:$0x2]
    %vm297 = vcmask 1041409
    %v298 = vsel %vm297, %v296, %v294
    %s299 = scalar_lea.vmem %s0, 73
    %v300 = vld [vmem:[%s299] sm:$0x4]
    %vm301 = vcmask 1042434
    %v302 = vsel %vm301, %v300, %v298
    %303 = vrot.lane.b32.xlu0 %v302, 44
    %v304 = vpop.permute.xlu0 %303
    %vm305 = vcmask 392544
    %306 = vst.msk [vmem:[#allocation0] sm:$0x7] %vm305, %v304
    %s307 = scalar_lea.vmem %s0, 10
    %v308 = vld [vmem:[%s307] sm:$0x1]
    %s309 = scalar_lea.vmem %s0, 41
    %v310 = vld [vmem:[%s309] sm:$0x2]
    %vm311 = vcmask 1041409
    %v312 = vsel %vm311, %v310, %v308
    %s313 = scalar_lea.vmem %s0, 72
    %v314 = vld [vmem:[%s313] sm:$0x4]
    %vm315 = vcmask 1042434
    %v316 = vsel %vm315, %v314, %v312
    %317 = vrot.lane.b32.xlu0 %v316, 40
    %v318 = vpop.permute.xlu0 %317
    %vm319 = vcmask 359744
    %320 = vst.msk [vmem:[#allocation0] sm:$0x7] %vm319, %v318
    %s321 = scalar_lea.vmem %s0, 9
    %v322 = vld [vmem:[%s321] sm:$0x1]
    %s323 = scalar_lea.vmem %s0, 40
    %v324 = vld [vmem:[%s323] sm:$0x2]
    %vm325 = vcmask 1041409
    %v326 = vsel %vm325, %v324, %v322
    %s327 = scalar_lea.vmem %s0, 71
    %v328 = vld [vmem:[%s327] sm:$0x4]
    %vm329 = vcmask 1042434
    %v330 = vsel %vm329, %v328, %v326
    %331 = vrot.lane.b32.xlu0 %v330, 36
    %v332 = vpop.permute.xlu0 %331
    %vm333 = vcmask 326944
    %334 = vst.msk [vmem:[#allocation0] sm:$0x7] %vm333, %v332
    %s335 = scalar_lea.vmem %s0, 8
    %v336 = vld [vmem:[%s335] sm:$0x1]
    %s337 = scalar_lea.vmem %s0, 39
    %v338 = vld [vmem:[%s337] sm:$0x2]
    %vm339 = vcmask 1041409
    %v340 = vsel %vm339, %v338, %v336
    %s341 = scalar_lea.vmem %s0, 70
    %v342 = vld [vmem:[%s341] sm:$0x4]
    %vm343 = vcmask 1042434
    %v344 = vsel %vm343, %v342, %v340
    %345 = vrot.lane.b32.xlu0 %v344, 32
    %v346 = vpop.permute.xlu0 %345
    %vm347 = vcmask 294144
    %348 = vst.msk [vmem:[#allocation0] sm:$0x7] %vm347, %v346
    %s349 = scalar_lea.vmem %s0, 7
    %v350 = vld [vmem:[%s349] sm:$0x1]
    %s351 = scalar_lea.vmem %s0, 38
    %v352 = vld [vmem:[%s351] sm:$0x2]
    %vm353 = vcmask 1041409
    %v354 = vsel %vm353, %v352, %v350
    %s355 = scalar_lea.vmem %s0, 69
    %v356 = vld [vmem:[%s355] sm:$0x4]
    %vm357 = vcmask 1042434
    %v358 = vsel %vm357, %v356, %v354
    %359 = vrot.lane.b32.xlu0 %v358, 28
    %v360 = vpop.permute.xlu0 %359
    %vm361 = vcmask 261344
    %362 = vst.msk [vmem:[#allocation0] sm:$0x7] %vm361, %v360
    %s363 = scalar_lea.vmem %s0, 6
    %v364 = vld [vmem:[%s363] sm:$0x1]
    %s365 = scalar_lea.vmem %s0, 37
    %v366 = vld [vmem:[%s365] sm:$0x2]
    %vm367 = vcmask 1041409
    %v368 = vsel %vm367, %v366, %v364
    %s369 = scalar_lea.vmem %s0, 68
    %v370 = vld [vmem:[%s369] sm:$0x4]
    %vm371 = vcmask 1042434
    %v372 = vsel %vm371, %v370, %v368
    %373 = vrot.lane.b32.xlu0 %v372, 24
    %v374 = vpop.permute.xlu0 %373
    %vm375 = vcmask 228544
    %376 = vst.msk [vmem:[#allocation0] sm:$0x7] %vm375, %v374
    %s377 = scalar_lea.vmem %s0, 5
    %v378 = vld [vmem:[%s377] sm:$0x1]
    %s379 = scalar_lea.vmem %s0, 36
    %v380 = vld [vmem:[%s379] sm:$0x2]
    %vm381 = vcmask 1041409
    %v382 = vsel %vm381, %v380, %v378
    %s383 = scalar_lea.vmem %s0, 67
    %v384 = vld [vmem:[%s383] sm:$0x4]
    %vm385 = vcmask 1042434
    %v386 = vsel %vm385, %v384, %v382
    %387 = vrot.lane.b32.xlu0 %v386, 20
    %v388 = vpop.permute.xlu0 %387
    %vm389 = vcmask 195744
    %390 = vst.msk [vmem:[#allocation0] sm:$0x7] %vm389, %v388
    %s391 = scalar_lea.vmem %s0, 4
    %v392 = vld [vmem:[%s391] sm:$0x1]
    %s393 = scalar_lea.vmem %s0, 35
    %v394 = vld [vmem:[%s393] sm:$0x2]
    %vm395 = vcmask 1041409
    %v396 = vsel %vm395, %v394, %v392
    %s397 = scalar_lea.vmem %s0, 66
    %v398 = vld [vmem:[%s397] sm:$0x4]
    %vm399 = vcmask 1042434
    %v400 = vsel %vm399, %v398, %v396
    %401 = vrot.lane.b32.xlu0 %v400, 16
    %v402 = vpop.permute.xlu0 %401
    %vm403 = vcmask 162944
    %404 = vst.msk [vmem:[#allocation0] sm:$0x7] %vm403, %v402
    %s405 = scalar_lea.vmem %s0, 3
    %v406 = vld [vmem:[%s405] sm:$0x1]
    %s407 = scalar_lea.vmem %s0, 34
    %v408 = vld [vmem:[%s407] sm:$0x2]
    %vm409 = vcmask 1041409
    %v410 = vsel %vm409, %v408, %v406
    %s411 = scalar_lea.vmem %s0, 65
    %v412 = vld [vmem:[%s411] sm:$0x4]
    %vm413 = vcmask 1042434
    %v414 = vsel %vm413, %v412, %v410
    %415 = vrot.lane.b32.xlu0 %v414, 12
    %v416 = vpop.permute.xlu0 %415
    %vm417 = vcmask 130144
    %418 = vst.msk [vmem:[#allocation0] sm:$0x7] %vm417, %v416
    %s419 = scalar_lea.vmem %s0, 2
    %v420 = vld [vmem:[%s419] sm:$0x1]
    %s421 = scalar_lea.vmem %s0, 33
    %v422 = vld [vmem:[%s421] sm:$0x2]
    %vm423 = vcmask 1041409
    %v424 = vsel %vm423, %v422, %v420
    %s425 = scalar_lea.vmem %s0, 64
    %v426 = vld [vmem:[%s425] sm:$0x4]
    %vm427 = vcmask 1042434
    %v428 = vsel %vm427, %v426, %v424
    %429 = vrot.lane.b32.xlu0 %v428, 8
    %v430 = vpop.permute.xlu0 %429
    %vm431 = vcmask 97344
    %432 = vst.msk [vmem:[#allocation0] sm:$0x7] %vm431, %v430
    %s433 = scalar_lea.vmem %s0, 1
    %v434 = vld [vmem:[%s433] sm:$0x1]
    %s435 = scalar_lea.vmem %s0, 32
    %v436 = vld [vmem:[%s435] sm:$0x2]
    %vm437 = vcmask 1041409
    %v438 = vsel %vm437, %v436, %v434
    %s439 = scalar_lea.vmem %s0, 63
    %v440 = vld [vmem:[%s439] sm:$0x4]
    %vm441 = vcmask 1042434
    %v442 = vsel %vm441, %v440, %v438
    %443 = vrot.lane.b32.xlu0 %v442, 4
    %v444 = vpop.permute.xlu0 %443
    %vm445 = vcmask 64544
    %446 = vst.msk [vmem:[#allocation0] sm:$0x7] %vm445, %v444
    %s448 = ssub.s32 16, 1
    %v449 = vld [vmem:[#allocation0] sm:%s448]
    %s451 = ssub.s32 16, 1
    %452 = vst [vmem:[%s1] sm:%s451] %v449

// kernel: pce_loss.1
$region0: #{pce_loss.1}
  #allocation0 [shape = 'u32[]', space=smem, size = 0x4, offset = 0x4, fixed_abs, tag = 'smem constant byte address 0x4 - core index']
  #allocation1 [shape = 'u32[72,128]{1,0:T(1,128)}', space=vmem, size = 0x9000, scoped, tag = 'internal scratch']
  #allocation2 [shape = 'f32[1,32]{1,0:T(1,128)}', space=vmem, size = 0x200, scoped, tag = 'scratch operand']
  %s0 = inlined_call_operand.vmem [shape: f32[1,128], index: 0, kind: input, shape index: {}]
  %s1 = inlined_call_operand.vmem [shape: f32[1,32], index: 1, kind: input, shape index: {}]
  %s2 = inlined_call_operand.vmem [shape: f32[3,128], index: 2, kind: input, shape index: {}]
  %s3 = inlined_call_operand.vmem [shape: f32[128,32], index: 3, kind: input, shape index: {}]
  %s4 = inlined_call_operand.vmem [shape: f32[2,1,32], index: 4, kind: output, shape index: {}]
  %s5 = sld [smem:[#allocation0]]
  $region65: #{pce_loss.1} parent=0
    _
  %s7 = ssub.s32 1, %s5
  %s8 = scalar_select 0, %s7, %s5
  loop: start=0, step=1, limit=4
  $region2: #{pce_loss.1} parent=0 // loop_pre_header
    _
  $region3: #{pce_loss.1} parent=0 // loop_header
    %s10 = sphi 0, %s14
    %p11 = scmp.ge.s32.totalorder %s10, 4
    %s17 = sphi 0, %s29
    %s18 = sphi 0, %s25
    %s19 = sphi 0, %s17
    %s20 = sphi 0, %s18
    %s21 = sphi 0, %s19
    %s22 = sphi 0, %s20
    %s38 = sphi 0, %s40
    %s41 = sphi 0, %s38
    %s42 = sphi 0, %s41
    %s58 = sphi 0, %s42
    %s70 = sphi 0, %s72
    %s73 = sphi 0, %s70
    %s74 = sphi 0, %s73
    %s90 = sphi 0, %s74
    %s94 = sphi 0, %s94
    %s96 = sphi 0, %s94
    %s97 = sphi 0, %s96
    %s111 = sphi 0, %s97
    %s115 = sphi 0, %s115
    %s117 = sphi 0, %s115
    %s118 = sphi 0, %s117
    %s132 = sphi 0, %s118
    %s138 = sphi 0, %s140
    %s141 = sphi 0, %s138
    %s142 = sphi 0, %s141
    %s158 = sphi 0, %s142
  $region4: #{pce_loss.1} parent=0 // loop_header_branch
    %13 = sbr.rel (%p11) target = $region8
  $region5: #{pce_loss.1} parent=0 // loop_body
    %s15 = ssub.s32 %s10, 1
    %s16 = ssub.s32 %s10, 2
    %s23 = sadd.s32 1, %s18
    %p24 = scmp.ge.s32.totalorder %s23, 1
    %s25 = scalar_select %p24, 0, %s23
    %s26 = sadd.s32 1, %s17
    %s27 = scalar_select %p24, %s26, %s17
    %p28 = scmp.ge.s32.totalorder %s27, 2
    %s29 = scalar_select %p28, 0, %s27
    %s30 = sadd.s32 %s17, %s18
    %p31 = scmp.lt.s32.totalorder %s30, 0
    %s32 = scalar_select %p31, %s30, 0
    %s33 = sadd.s32 %s29, %s25
    %p34 = scmp.lt.s32.totalorder %s33, 0
    %s35 = scalar_select %p34, %s33, 0
    %s36 = ssub.s32 %s32, %s35
    %p37 = scmp.eq.s32.totalorder %s36, 0
    %s39 = sadd.s32 %s38, 1
    %s40 = scalar_select %p37, %s38, %s39
    %p43 = pneg %p37
    %p44 = scmp.eq.s32.totalorder %s10, 1
    %p45 = por %p43, %p44
    %p46 = scmp.ne.s32.totalorder %s38, %s41
    %p47 = scmp.eq.s32.totalorder %s10, 0
    %p48 = por %p46, %p47
    %p49 = scmp.ne.s32.totalorder %s38, %s41
    %p50 = scmp.eq.s32.totalorder %s15, 1
    %p51 = por %p49, %p50
    %p52 = scmp.ne.s32.totalorder %s41, %s42
    %p53 = scmp.eq.s32.totalorder %s15, 0
    %p54 = por %p52, %p53
    %p55 = scmp.ne.s32.totalorder %s41, %s42
    %p56 = scmp.eq.s32.totalorder %s16, 1
    %p57 = por %p55, %p56
    %p59 = scmp.ne.s32.totalorder %s42, %s58
    %p60 = scmp.eq.s32.totalorder %s16, 0
    %p61 = por %p59, %p60
    %s62 = sadd.s32 %s17, %s18
    %p63 = scmp.lt.s32.totalorder %s62, 0
    %s64 = scalar_select %p63, %s62, 0
    %s65 = sadd.s32 %s29, %s25
    %p66 = scmp.lt.s32.totalorder %s65, 0
    %s67 = scalar_select %p66, %s65, 0
    %s68 = ssub.s32 %s64, %s67
    %p69 = scmp.eq.s32.totalorder %s68, 0
    %s71 = sadd.s32 %s70, 1
    %s72 = scalar_select %p69, %s70, %s71
    %p75 = pneg %p69
    %p76 = scmp.eq.s32.totalorder %s10, 1
    %p77 = por %p75, %p76
    %p78 = scmp.ne.s32.totalorder %s70, %s73
    %p79 = scmp.eq.s32.totalorder %s10, 0
    %p80 = por %p78, %p79
    %p81 = scmp.ne.s32.totalorder %s70, %s73
    %p82 = scmp.eq.s32.totalorder %s15, 1
    %p83 = por %p81, %p82
    %p84 = scmp.ne.s32.totalorder %s73, %s74
    %p85 = scmp.eq.s32.totalorder %s15, 0
    %p86 = por %p84, %p85
    %p87 = scmp.ne.s32.totalorder %s73, %s74
    %p88 = scmp.eq.s32.totalorder %s16, 1
    %p89 = por %p87, %p88
    %p91 = scmp.ne.s32.totalorder %s74, %s90
    %p92 = scmp.eq.s32.totalorder %s16, 0
    %p93 = por %p91, %p92
    %s95 = sadd.s32 %s94, 1
    %p98 = scmp.eq.s32.totalorder %s10, 1
    %p99 = scmp.ne.s32.totalorder %s94, %s96
    %p100 = scmp.eq.s32.totalorder %s10, 0
    %p101 = por %p99, %p100
    %p102 = scmp.ne.s32.totalorder %s94, %s96
    %p103 = scmp.eq.s32.totalorder %s15, 1
    %p104 = por %p102, %p103
    %p105 = scmp.ne.s32.totalorder %s96, %s97
    %p106 = scmp.eq.s32.totalorder %s15, 0
    %p107 = por %p105, %p106
    %p108 = scmp.ne.s32.totalorder %s96, %s97
    %p109 = scmp.eq.s32.totalorder %s16, 1
    %p110 = por %p108, %p109
    %p112 = scmp.ne.s32.totalorder %s97, %s111
    %p113 = scmp.eq.s32.totalorder %s16, 0
    %p114 = por %p112, %p113
    %s116 = sadd.s32 %s115, 1
    %p119 = scmp.eq.s32.totalorder %s10, 1
    %p120 = scmp.ne.s32.totalorder %s115, %s117
    %p121 = scmp.eq.s32.totalorder %s10, 0
    %p122 = por %p120, %p121
    %p123 = scmp.ne.s32.totalorder %s115, %s117
    %p124 = scmp.eq.s32.totalorder %s15, 1
    %p125 = por %p123, %p124
    %p126 = scmp.ne.s32.totalorder %s117, %s118
    %p127 = scmp.eq.s32.totalorder %s15, 0
    %p128 = por %p126, %p127
    %p129 = scmp.ne.s32.totalorder %s117, %s118
    %p130 = scmp.eq.s32.totalorder %s16, 1
    %p131 = por %p129, %p130
    %p133 = scmp.ne.s32.totalorder %s118, %s132
    %p134 = scmp.eq.s32.totalorder %s16, 0
    %p135 = por %p133, %p134
    %s136 = ssub.s32 %s17, %s29
    %p137 = scmp.eq.s32.totalorder %s136, 0
    %s139 = sadd.s32 %s138, 1
    %s140 = scalar_select %p137, %s138, %s139
    %p143 = pneg %p137
    %p144 = scmp.eq.s32.totalorder %s10, 1
    %p145 = por %p143, %p144
    %p146 = scmp.ne.s32.totalorder %s138, %s141
    %p147 = scmp.eq.s32.totalorder %s10, 0
    %p148 = por %p146, %p147
    %p149 = scmp.ne.s32.totalorder %s138, %s141
    %p150 = scmp.eq.s32.totalorder %s15, 1
    %p151 = por %p149, %p150
    %p152 = scmp.ne.s32.totalorder %s141, %s142
    %p153 = scmp.eq.s32.totalorder %s15, 0
    %p154 = por %p152, %p153
    %p155 = scmp.ne.s32.totalorder %s141, %s142
    %p156 = scmp.eq.s32.totalorder %s16, 1
    %p157 = por %p155, %p156
    %p159 = scmp.ne.s32.totalorder %s142, %s158
    %p160 = scmp.eq.s32.totalorder %s16, 0
    %p161 = por %p159, %p160
    %p162 = scmp.le.s32.totalorder 1, %s10
    %p163 = scmp.lt.s32.totalorder %s10, 3
    %p164 = pnand %p162, %p163
    %p165 = pneg %p164
    // Predicated region
    $region9: #{pce_loss.1} parent=5 // pred_check
      _
    $region10: #{pce_loss.1} parent=5 // pred_check_branch
      %167 = sbr.rel (%p164) target = $region12
    $region11: #{pce_loss.1} parent=5 // pred_region
      %s168 = ssub.s32 %s10, 1
      // Predicated region
      $region13: #{pce_loss.1} parent=11 // pred_check
        %p169 = pneg %p107
      $region14: #{pce_loss.1} parent=11 // pred_check_branch
        %171 = sbr.rel (%p169) target = $region16
      $region15: #{pce_loss.1} parent=11 // pred_region
        _
      $region16: #{pce_loss.1} parent=11 // pred_fallthru
        _
      // Predicated region
      $region17: #{pce_loss.1} parent=11 // pred_check
        %p172 = pneg %p128
      $region18: #{pce_loss.1} parent=11 // pred_check_branch
        %174 = sbr.rel (%p172) target = $region20
      $region19: #{pce_loss.1} parent=11 // pred_region
        _
      $region20: #{pce_loss.1} parent=11 // pred_fallthru
        _
    $region12: #{pce_loss.1} parent=5 // pred_fallthru
      _
    %p175 = scmp.lt.s32.totalorder %s10, 2
    // Predicated region
    $region21: #{pce_loss.1} parent=5 // pred_check
      %p176 = pneg %p175
    $region22: #{pce_loss.1} parent=5 // pred_check_branch
      %178 = sbr.rel (%p176) target = $region24
    $region23: #{pce_loss.1} parent=5 // pred_region
      // Predicated region
      $region25: #{pce_loss.1} parent=23 // pred_check
        %p179 = pneg %p48
      $region26: #{pce_loss.1} parent=23 // pred_check_branch
        %181 = sbr.rel (%p179) target = $region28
      $region27: #{pce_loss.1} parent=23 // pred_region
        %s182 = sadd.s32 %s17, %s18
        %p183 = scmp.lt.s32.totalorder %s182, 0
        %s184 = scalar_select %p183, %s182, 0
        %s185 = smul.u32 8, %s184
        %s186 = ssub.s32 1, %s185
        %p187 = scmp.lt.s32.totalorder %s185, 0
        %s188 = scalar_select %p187, %s185, 0
        %s189 = scalar_lea.vmem %s0, %s188
        %s190 = sadd.s32 %s17, %s18
        %p191 = scmp.lt.s32.totalorder %s190, 0
        %s192 = scalar_select %p191, %s190, 0
        %s193 = smul.u32 8, %s192
        %s194 = ssub.s32 1, %s193
      $region28: #{pce_loss.1} parent=23 // pred_fallthru
        _
      // Predicated region
      $region29: #{pce_loss.1} parent=23 // pred_check
        %p195 = pneg %p80
      $region30: #{pce_loss.1} parent=23 // pred_check_branch
        %197 = sbr.rel (%p195) target = $region32
      $region31: #{pce_loss.1} parent=23 // pred_region
        %s198 = sadd.s32 %s17, %s18
        %p199 = scmp.lt.s32.totalorder %s198, 0
        %s200 = scalar_select %p199, %s198, 0
        %s201 = smul.u32 8, %s200
        %s202 = ssub.s32 1, %s201
        %p203 = scmp.lt.s32.totalorder %s201, 0
        %s204 = scalar_select %p203, %s201, 0
        %s205 = scalar_lea.vmem %s1, %s204
        %s206 = sadd.s32 %s17, %s18
        %p207 = scmp.lt.s32.totalorder %s206, 0
        %s208 = scalar_select %p207, %s206, 0
        %s209 = smul.u32 8, %s208
        %s210 = ssub.s32 1, %s209
      $region32: #{pce_loss.1} parent=23 // pred_fallthru
        _
    $region24: #{pce_loss.1} parent=5 // pred_fallthru
      _
    %p211 = scmp.le.s32.totalorder 1, %s10
    %p212 = scmp.lt.s32.totalorder %s10, 3
    %p213 = pnand %p211, %p212
    %p214 = pneg %p213
    // Predicated region
    $region33: #{pce_loss.1} parent=5 // pred_check
      _
    $region34: #{pce_loss.1} parent=5 // pred_check_branch
      %216 = sbr.rel (%p213) target = $region36
    $region35: #{pce_loss.1} parent=5 // pred_region
      %s217 = ssub.s32 %s10, 1
      %s218 = sadd.s32 %s19, %s20
      %p219 = scmp.lt.s32.totalorder %s218, 0
      %s220 = scalar_select %p219, %s218, 0
      %s221 = smul.u32 8, %s220
      %s222 = ssub.s32 1, %s221
      %p223 = scmp.lt.s32.totalorder %s221, 0
      %s224 = scalar_select %p223, %s221, 0
      %s225 = scalar_lea.vmem %s0, %s224
      %p226 = pneg %p54
      %p227 = pneg %p51
      %s228 = sadd.s32 %s19, %s20
      %p229 = scmp.lt.s32.totalorder %s228, 0
      %s230 = scalar_select %p229, %s228, 0
      %s231 = smul.u32 8, %s230
      %s232 = ssub.s32 1, %s231
      %p233 = scmp.lt.s32.totalorder %s231, 0
      %s234 = scalar_select %p233, %s231, 0
      %s235 = scalar_lea.vmem %s1, %s234
      %p236 = pneg %p86
      %p237 = pneg %p83
      %p238 = pneg %p107
      %p239 = pneg %p104
      %p240 = pneg %p128
      %p241 = pneg %p125
      %p242 = pneg %p154
      %p243 = pneg %p151
      %p244 = scmp.lt.s32.totalorder %s19, 1
      %s245 = scalar_select %p244, %s19, 1
      %s246 = scalar_lea.vmem %s4, %s245
      %s247 = sadd.s32 %s19, %s20
      %p248 = scmp.lt.s32.totalorder %s247, 0
      %s249 = scalar_select %p248, %s247, 0
      %s250 = smul.u32 8, %s249
      %s251 = ssub.s32 1, %s250
      %p252 = scmp.lt.s32.totalorder %s250, 0
      %s253 = scalar_select %p252, %s250, 0
      %s254 = scalar_lea.vmem %s0, %s253
      %s255 = sadd.s32 %s19, %s20
      %p256 = scmp.lt.s32.totalorder %s255, 0
      %s257 = scalar_select %p256, %s255, 0
      %s258 = smul.u32 8, %s257
      %s259 = ssub.s32 1, %s258
      %s260 = sadd.s32 %s19, %s20
      %p261 = scmp.lt.s32.totalorder %s260, 0
      %s262 = scalar_select %p261, %s260, 0
      %s263 = smul.u32 8, %s262
      %s264 = ssub.s32 1, %s263
      %p265 = scmp.lt.s32.totalorder %s263, 0
      %s266 = scalar_select %p265, %s263, 0
      %s267 = scalar_lea.vmem %s1, %s266
      %s268 = sadd.s32 %s19, %s20
      %p269 = scmp.lt.s32.totalorder %s268, 0
      %s270 = scalar_select %p269, %s268, 0
      %s271 = smul.u32 8, %s270
      %s272 = ssub.s32 1, %s271
      %p273 = scmp.lt.s32.totalorder %s19, 1
      %s274 = scalar_select %p273, %s19, 1
      %s275 = scalar_lea.vmem %s4, %s274
      %p276 = scmp.eq.s32.totalorder %s20, 0
      // Predicated region
      $region37: #{pce_loss.1} parent=35 // pred_check
        %p277 = pneg %p276
      $region38: #{pce_loss.1} parent=35 // pred_check_branch
        %279 = sbr.rel (%p277) target = $region40
      $region39: #{pce_loss.1} parent=35 // pred_region
        %vm280 = vcmask 253952
        %281 = vst.msk [vmem:[#allocation2] sm:$0x1] %vm280, 0.0
      $region40: #{pce_loss.1} parent=35 // pred_fallthru
        _
      %v282 = vld [vmem:[%s254] sm:$0xff]
      %v283 = vld [vmem:[%s2] sm:$0x7]
      %v284 = vperm.slane %v283, 2
      %v285 = vmul.f32 %v284, %v282
      %v286 = vperm.slane %v283, 1
      %v287 = vadd.f32 %v285, %v286
      %v288 = vmul.f32 %v287, %v282
      %v289 = vperm.slane %v283, 0
      %v290 = vadd.f32 %v288, %v289
      %v291 = vld [vmem:[%s3] sm:$0xff]
      %v292 = vld [vmem:[%s3 + $0x8] sm:$0xff]
      %v293 = vld [vmem:[%s3 + $0x10] sm:$0xff]
      %v294 = vld [vmem:[%s3 + $0x18] sm:$0xff]
      %v295 = vld [vmem:[%s3 + $0x20] sm:$0xff]
      %v296 = vld [vmem:[%s3 + $0x28] sm:$0xff]
      %v297 = vld [vmem:[%s3 + $0x30] sm:$0xff]
      %v298 = vld [vmem:[%s3 + $0x38] sm:$0xff]
      %v299 = vld [vmem:[%s3 + $0x40] sm:$0xff]
      %v300 = vld [vmem:[%s3 + $0x48] sm:$0xff]
      %v301 = vld [vmem:[%s3 + $0x50] sm:$0xff]
      %v302 = vld [vmem:[%s3 + $0x58] sm:$0xff]
      %v303 = vld [vmem:[%s3 + $0x60] sm:$0xff]
      %v304 = vld [vmem:[%s3 + $0x68] sm:$0xff]
      %v305 = vld [vmem:[%s3 + $0x70] sm:$0xff]
      %v306 = vld [vmem:[%s3 + $0x78] sm:$0xff]
      %307 = vmatpush.msra.mxu0 %v306
      %308 = vmatpush.msra.mxu0 %v305
      %309 = vmatpush.msra.mxu0 %v304
      %310 = vmatpush.msra.mxu0 %v303
      %311 = vmatpush.msra.mxu0 %v302
      %312 = vmatpush.msra.mxu0 %v301
      %313 = vmatpush.msra.mxu0 %v300
      %314 = vmatpush.msra.mxu0 %v299
      %315 = vmatpush.msra.mxu0 %v298
      %316 = vmatpush.msra.mxu0 %v297
      %317 = vmatpush.msra.mxu0 %v296
      %318 = vmatpush.msra.mxu0 %v295
      %319 = vmatpush.msra.mxu0 %v294
      %320 = vmatpush.msra.mxu0 %v293
      %321 = vmatpush.msra.mxu0 %v292
      %322 = vmatpush.msra.mxu0 %v291
      %323 = vmatmul.f32.gmra.mxu0 %v290
      %v324 = vpop.f32.mrf.mxu0
      %v325 = vadd.f32 0.0, %v324
      %326 = vdwg.mxu0
      %v327 = vld [vmem:[%s267] sm:$0xff]
      %v328 = vsub.f32 %v325, %v327
      %v329 = vand.u32 2147483647, %v328
      %s330 = sadd.s32 %s19, %s20
      %p331 = scmp.ge.s32.totalorder %s330, 0
      // Predicated region
      $region41: #{pce_loss.1} parent=35 // pred_check
        %p332 = pneg %p331
      $region42: #{pce_loss.1} parent=35 // pred_check_branch
        %334 = sbr.rel (%p332) target = $region44
      $region43: #{pce_loss.1} parent=35 // pred_region
        %s335 = smul.u32 %s330, 8
        %v336 = vlaneseq
        %v337 = vshrl.u32 %v336, 7
        %v338 = vstv %s335
        %v339 = vadd.s32 %v338, %v337
        %vm340 = vcmp.lt.s32.totalorder %v339, 1
        %v341 = vsel %vm340, %v329, 0.0
        %v342 = vld [vmem:[#allocation2] sm:$0x1]
        %vm343 = vcmask 261120
        %v344 = vsel %vm343, %v341, 0.0
        %v345 = vrot.slane %v344, 4
        %v346 = vadd.f32 %v344, %v345
        %v347 = vrot.slane %v346, 2
        %v348 = vadd.f32 %v346, %v347
        %v349 = vrot.slane %v348, 1
        %v350 = vadd.f32 %v348, %v349
        %v351 = vadd.f32 %v342, %v350
        %vm352 = vcmask 253952
        %353 = vst.msk [vmem:[#allocation2] sm:$0x1] %vm352, %v351
      $region44: #{pce_loss.1} parent=35 // pred_fallthru
        _
      %p354 = scmp.lt.s32.totalorder %s330, 0
      // Predicated region
      $region45: #{pce_loss.1} parent=35 // pred_check
        %p355 = pneg %p354
      $region46: #{pce_loss.1} parent=35 // pred_check_branch
        %357 = sbr.rel (%p355) target = $region48
      $region47: #{pce_loss.1} parent=35 // pred_region
        %v358 = vld [vmem:[#allocation2] sm:$0x1]
        %vm359 = vcmask 261120
        %v360 = vsel %vm359, %v329, 0.0
        %v361 = vrot.slane %v360, 4
        %v362 = vadd.f32 %v360, %v361
        %v363 = vrot.slane %v362, 2
        %v364 = vadd.f32 %v362, %v363
        %v365 = vrot.slane %v364, 1
        %v366 = vadd.f32 %v364, %v365
        %v367 = vadd.f32 %v358, %v366
        %vm368 = vcmask 253952
        %369 = vst.msk [vmem:[#allocation2] sm:$0x1] %vm368, %v367
      $region48: #{pce_loss.1} parent=35 // pred_fallthru
        _
      // Predicated region
      $region49: #{pce_loss.1} parent=35 // pred_check
        %p370 = pneg %p276
      $region50: #{pce_loss.1} parent=35 // pred_check_branch
        %372 = sbr.rel (%p370) target = $region52
      $region51: #{pce_loss.1} parent=35 // pred_region
        %v373 = vld [vmem:[#allocation2] sm:$0x1]
        %vm374 = vcmask 253952
        %375 = vst.msk [vmem:[%s275] sm:$0x1] %vm374, %v373
      $region52: #{pce_loss.1} parent=35 // pred_fallthru
        _
      %p376 = scmp.lt.s32.totalorder %s19, 1
      %s377 = scalar_select %p376, %s19, 1
      %s378 = scalar_lea.vmem %s4, %s377
      // Predicated region
      $region53: #{pce_loss.1} parent=35 // pred_check
        %p379 = pneg %p151
      $region54: #{pce_loss.1} parent=35 // pred_check_branch
        %381 = sbr.rel (%p379) target = $region56
      $region55: #{pce_loss.1} parent=35 // pred_region
        _
      $region56: #{pce_loss.1} parent=35 // pred_fallthru
        _
    $region36: #{pce_loss.1} parent=5 // pred_fallthru
      _
    %p382 = scmp.le.s32.totalorder 2, %s10
    // Predicated region
    $region57: #{pce_loss.1} parent=5 // pred_check
      %p383 = pneg %p382
    $region58: #{pce_loss.1} parent=5 // pred_check_branch
      %385 = sbr.rel (%p383) target = $region60
    $region59: #{pce_loss.1} parent=5 // pred_region
      %s386 = ssub.s32 %s10, 2
      // Predicated region
      $region61: #{pce_loss.1} parent=59 // pred_check
        %p387 = pneg %p157
      $region62: #{pce_loss.1} parent=59 // pred_check_branch
        %389 = sbr.rel (%p387) target = $region64
      $region63: #{pce_loss.1} parent=59 // pred_region
        %p390 = scmp.lt.s32.totalorder %s21, 1
        %s391 = scalar_select %p390, %s21, 1
        %s392 = scalar_lea.vmem %s4, %s391
      $region64: #{pce_loss.1} parent=59 // pred_fallthru
        _
    $region60: #{pce_loss.1} parent=5 // pred_fallthru
      _
  $region6: #{pce_loss.1} parent=0 // loop_footer
    %s14 = sadd.s32 1, %s10
  $region7: #{pce_loss.1} parent=0 // loop_footer_branch
    %9 = sbr.rel target = $region3
  $region8: #{pce_loss.1} parent=0 // loop_exit
    _

</llo_original>
